<compile_context>
chip_gen: v6e
topology: v6e:2x2x1
jax: 0.10.0
libtpu: 0.0.40
codegen_flags: <defaults>
</compile_context>

<pallas_src>
import functools

import jax
import jax.numpy as jnp
from jax import lax
from jax.experimental import pallas as pl
from jax.experimental.pallas import tpu as pltpu


def _round_up(x: int, m: int) -> int:
    return ((x + m - 1) // m) * m


def _fit_tile(extent: int, max_tile: int, align: int):
    """Pick a tile size (multiple of `align`, <= max_tile) minimizing padding
    of `extent`.  Returns (tile, padded_extent)."""
    aligned = _round_up(extent, align)
    max_tile = max(align, (max_tile // align) * align)
    if aligned <= max_tile:
        return aligned, aligned                  # single full-extent tile
    n_tiles = -(-aligned // max_tile)            # ceil
    tile = _round_up(-(-aligned // n_tiles), align)
    return tile, tile * n_tiles


def _fc_kernel(x_ref, w_ref, b_ref, o_ref, *, activation: bool):
    # x_ref: (tm, tk)   activation tile (f32 or bf16)
    # w_ref: (tk, tn)   pre-transposed weight tile (K on sublanes, N on lanes)
    # b_ref: (1, tn)    bias tile (f32)
    # o_ref: (tm, tn)   f32 output block, resident across the K grid axis
    k = pl.program_id(2)

    @pl.when(k == 0)
    def _():
        o_ref[...] = jnp.zeros_like(o_ref)

    # Plain MXU matmul: no transposed-RHS contraction, no per-step relayout.
    o_ref[...] += jnp.dot(x_ref[...], w_ref[...],
                          preferred_element_type=jnp.float32)

    @pl.when(k == pl.num_programs(2) - 1)
    def _():
        y = o_ref[...] + b_ref[...]              # (1, tn) broadcasts to (tm, tn)
        if activation:
            y = jnp.maximum(y, 0.0)
        o_ref[...] = y


def prepare_fc_params(weight, bias, *, tn: int = 512, tk: int = 1024,
                      use_bf16: bool = False):
    """One-time per-layer prep (do at construction, NOT per forward call):
    transpose the nn.Linear (N, K) weight to (K, N), pad N/K to tile multiples,
    and optionally cast to bf16 for the MXU's native rate."""
    N, K = weight.shape
    assert bias.shape == (N,)
    tn = min(tn, 1024)          # keep double-buffered working set <= ~40 MiB
    tk = min(tk, 2048)          # (safe under v7x's 64 MiB VMEM per TensorCore)
    tn_e, Np = _fit_tile(N, tn, 128)
    tk_e, Kp = _fit_tile(K, tk, 128)

    w_t = weight.T                               # (K, N)
    if (Kp, Np) != (K, N):
        w_t = jnp.pad(w_t, ((0, Kp - K), (0, Np - N)))
    if use_bf16:
        w_t = w_t.astype(jnp.bfloat16)

    b2 = bias if Np == N else jnp.pad(bias, (0, Np - N))
    b2 = b2.reshape(1, Np).astype(jnp.float32)

    return {
        "w_t": w_t, "b2": b2,
        "weight": weight, "bias": bias,          # native copies for the tiny fast path
        "N": N, "K": K, "Np": Np, "Kp": Kp,
        "tn": tn_e, "tk": tk_e, "use_bf16": use_bf16,
    }


def fc_apply(params, x, *, activation: bool = True, tm: int = 512,
             min_pallas_elems: int = 1 << 21):
    """y = relu(x @ W.T + b) (ReLU optional) using prepared params."""
    M, K = x.shape
    assert K == params["K"]
    N = params["N"]

    # Small-problem fast path: a single padded tile is dominated by fixed
    # dispatch/pipeline overhead; XLA's fused matmul wins for tiny layers.
    if M * N * K < min_pallas_elems:
        y = jnp.dot(x, params["weight"].T,
                    preferred_element_type=jnp.float32) + params["bias"]
        return jnp.maximum(y, 0.0) if activation else y

    use_bf16 = params["use_bf16"]
    tn_e, Np = params["tn"], params["Np"]
    tk_e, Kp = params["tk"], params["Kp"]

    tm = min(tm, 1024)
    m_align = 16 if use_bf16 else 8              # bf16 packs 2 rows per sublane
    tm_e, Mp = _fit_tile(M, tm, m_align)

    gm, gn, gk = Mp // tm_e, Np // tn_e, Kp // tk_e
    # v7x megacore: ensure >=2 blocks along a "parallel" grid axis so both
    # TensorCores get work (prefer splitting N for small-batch shapes).
    if gm == 1 and gn == 1 and tn_e % 256 == 0:
        tn_e //= 2
        gn = Np // tn_e

    x_in = x.astype(jnp.bfloat16) if use_bf16 else x
    if (Mp, Kp) != (M, K):
        # TODO(synk): a masked edge tile would avoid this HBM round trip for
        # ragged K; zero-padding is additive-identity-safe and simple.
        x_in = jnp.pad(x_in, ((0, Mp - M), (0, Kp - K)))

    in_bytes = 2 if use_bf16 else 4
    footprint = (2 * tm_e * tk_e * in_bytes        # x, double-buffered
                 + 2 * tk_e * tn_e * in_bytes      # W^T, double-buffered
                 + 2 * tm_e * tn_e * 4             # resident f32 output block
                 + 2 * tn_e * 4)                   # bias
    vmem_limit = int(min(56 << 20, max(footprint + (8 << 20), 32 << 20)))

    cost = pl.CostEstimate(
        flops=2 * Mp * Np * Kp,
        transcendentals=0,
        bytes_accessed=in_bytes * (Mp * Kp + Kp * Np) + 4 * (Mp * Np + Np),
    )

    out = pl.pallas_call(
        functools.partial(_fc_kernel, activation=activation),
        out_shape=jax.ShapeDtypeStruct((Mp, Np), jnp.float32),
        grid_spec=pltpu.PrefetchScalarGridSpec(
            num_scalar_prefetch=0,
            grid=(gm, gn, gk),
            in_specs=[
                pl.BlockSpec((tm_e, tk_e), lambda i, j, k: (i, k)),   # x    (Mp, Kp)
                pl.BlockSpec((tk_e, tn_e), lambda i, j, k: (k, j)),   # W^T  (Kp, Np)
                pl.BlockSpec((1, tn_e), lambda i, j, k: (0, j)),      # bias (1,  Np)
            ],
            out_specs=pl.BlockSpec((tm_e, tn_e), lambda i, j, k: (i, j)),
        ),
        compiler_params=pltpu.CompilerParams(
            dimension_semantics=("parallel", "parallel", "arbitrary"),
            vmem_limit_bytes=vmem_limit,
        ),
        cost_estimate=cost,
    )(x_in, params["w_t"], params["b2"])

    if (Mp, Np) != (M, N):
        out = out[:M, :N]
    return out


def fc_layer(x, weight, bias, *, activation: bool = True, use_bf16: bool = False,
             tm: int = 512, tn: int = 512, tk: int = 1024):
    """Convenience one-shot wrapper.  Prefer prepare_fc_params + fc_apply so the
    weight transpose/pad/cast is hoisted out of the per-call path."""
    params = prepare_fc_params(weight, bias, tn=tn, tk=tk, use_bf16=use_bf16)
    return fc_apply(params, x, activation=activation, tm=tm)


def _ref_fc(x, weight, bias, activation=True):
    y = jnp.dot(x, weight.T, precision=lax.Precision.HIGHEST) + bias
    return jnp.maximum(y, 0.0) if activation else y


if __name__ == "__main__":
    key = jax.random.PRNGKey(0)
    kx, kw, kb, kx2 = jax.random.split(key, 4)

    # MNIST-style FC layer: in_features=784, out_features=256, batch=128.
    M, K, N = 128, 784, 256
    x = jax.random.normal(kx, (M, K), dtype=jnp.float32)
    bound = 1.0 / (K ** 0.5)                     # nn.Linear default init range
    weight = jax.random.uniform(kw, (N, K), minval=-bound, maxval=bound,
                                dtype=jnp.float32)
    bias = jax.random.uniform(kb, (N,), minval=-bound, maxval=bound,
                              dtype=jnp.float32)

    # Hoisted one-time weight prep (transpose/pad), f32 Pallas path.
    params = prepare_fc_params(weight, bias)
    out = jax.block_until_ready(fc_apply(params, x, activation=True))
    ref = _ref_fc(x, weight, bias, activation=True)
    assert out.shape == (M, N)
    assert jnp.allclose(out, ref, atol=2e-4, rtol=2e-4)

    # activation=False (Identity) path.
    out_noact = jax.block_until_ready(fc_apply(params, x, activation=False))
    assert jnp.allclose(out_noact, _ref_fc(x, weight, bias, False),
                        atol=2e-4, rtol=2e-4)

    # Non-tile-aligned batch (exercises M padding + output slice).
    x_odd = jax.random.normal(kx2, (100, K), dtype=jnp.float32)
    out_odd = jax.block_until_ready(fc_apply(params, x_odd, activation=True))
    assert jnp.allclose(out_odd, _ref_fc(x_odd, weight, bias, True),
                        atol=2e-4, rtol=2e-4)

    # Optional bf16-MXU path (weights cast once at prep; looser tolerance).
    params_bf16 = prepare_fc_params(weight, bias, use_bf16=True)
    out_bf16 = jax.block_until_ready(fc_apply(params_bf16, x, activation=True))
    assert jnp.allclose(out_bf16, ref, atol=5e-2, rtol=5e-2)

    # Tiny layer (original 16x32x16 test) goes through the XLA fast path.
    Ms, Ks, Ns = 16, 32, 16
    xs = jax.random.normal(kx, (Ms, Ks), dtype=jnp.float32)
    bs_bound = 1.0 / (Ks ** 0.5)
    ws = jax.random.uniform(kw, (Ns, Ks), minval=-bs_bound, maxval=bs_bound,
                            dtype=jnp.float32)
    bs = jax.random.uniform(kb, (Ns,), minval=-bs_bound, maxval=bs_bound,
                            dtype=jnp.float32)
    ps = prepare_fc_params(ws, bs)
    outs = jax.block_until_ready(fc_apply(ps, xs, activation=True))
    assert jnp.allclose(outs, _ref_fc(xs, ws, bs, True), atol=1e-4, rtol=1e-4)

    print("KERNEL_OK")
</pallas_src>

<mosaic_0001>
module attributes {stable_mosaic.version = 11 : i64} {
  func.func @_fc_kernel(%arg0: i32, %arg1: i32, %arg2: i32, %arg3: memref<128x896xf32, #tpu.memory_space<vmem>>, %arg4: memref<896x128xf32, #tpu.memory_space<vmem>>, %arg5: memref<1x128xf32, #tpu.memory_space<vmem>>, %arg6: memref<128x128xf32, #tpu.memory_space<vmem>>) attributes {dimension_semantics = [#tpu.dimension_semantics<parallel>, #tpu.dimension_semantics<parallel>, #tpu.dimension_semantics<arbitrary>], iteration_bounds = array<i64: 1, 2, 1>, scalar_prefetch = 0 : i64, scratch_operands = 0 : i64, tpu.core_type = #tpu.core_type<tc>, window_params = [{transform_indices = @transform_0, window_bounds = array<i64: 128, 896>}, {transform_indices = @transform_1, window_bounds = array<i64: 896, 128>}, {transform_indices = @transform_2, window_bounds = array<i64: 1, 128>}, {transform_indices = @transform_3, window_bounds = array<i64: 128, 128>}]} {
    %c0_i32 = arith.constant 0 : i32
    %0 = arith.cmpi eq, %arg2, %c0_i32 : i32
    %1 = arith.extui %0 : i1 to i32
    %c0_i32_0 = arith.constant 0 : i32
    %2 = arith.cmpi ne, %1, %c0_i32_0 : i32
    scf.if %2 {
      %cst_10 = arith.constant 0.000000e+00 : f32
      %12 = vector.broadcast %cst_10 : f32 to vector<128x128xf32>
      %c0_11 = arith.constant 0 : index
      %c0_12 = arith.constant 0 : index
      %13 = vector.load %arg6[%c0_11, %c0_12] : memref<128x128xf32, #tpu.memory_space<vmem>>, vector<128x128xf32>
      tpu.vector_store %arg6[%c0_11, %c0_12], %12 {strides = array<i32>} : memref<128x128xf32, #tpu.memory_space<vmem>>, vector<128x128xf32>,
    } else {
    }
    %c0 = arith.constant 0 : index
    %c0_1 = arith.constant 0 : index
    %3 = vector.load %arg6[%c0, %c0_1] : memref<128x128xf32, #tpu.memory_space<vmem>>, vector<128x128xf32>
    %c0_2 = arith.constant 0 : index
    %c0_3 = arith.constant 0 : index
    %4 = vector.load %arg3[%c0_2, %c0_3] : memref<128x896xf32, #tpu.memory_space<vmem>>, vector<128x896xf32>
    %c0_4 = arith.constant 0 : index
    %c0_5 = arith.constant 0 : index
    %5 = vector.load %arg4[%c0_4, %c0_5] : memref<896x128xf32, #tpu.memory_space<vmem>>, vector<896x128xf32>
    %cst = arith.constant dense<0.000000e+00> : vector<128x128xf32>
    %6 = tpu.matmul %4, %5, %cst {dimension_numbers = #tpu.dot_dimension_numbers<[1], [0], [0], [1], [0, 0, 1, 1], [], []>} : vector<128x896xf32>, vector<896x128xf32>, vector<128x128xf32> -> vector<128x128xf32>
    %7 = arith.addf %3, %6 : vector<128x128xf32>
    %c0_6 = arith.constant 0 : index
    %c0_7 = arith.constant 0 : index
    %8 = vector.load %arg6[%c0_6, %c0_7] : memref<128x128xf32, #tpu.memory_space<vmem>>, vector<128x128xf32>
    tpu.vector_store %arg6[%c0_6, %c0_7], %7 {strides = array<i32>} : memref<128x128xf32, #tpu.memory_space<vmem>>, vector<128x128xf32>,
    %c0_i32_8 = arith.constant 0 : i32
    %9 = arith.cmpi eq, %arg2, %c0_i32_8 : i32
    %10 = arith.extui %9 : i1 to i32
    %c0_i32_9 = arith.constant 0 : i32
    %11 = arith.cmpi ne, %10, %c0_i32_9 : i32
    scf.if %11 {
      %c0_10 = arith.constant 0 : index
      %c0_11 = arith.constant 0 : index
      %12 = vector.load %arg6[%c0_10, %c0_11] : memref<128x128xf32, #tpu.memory_space<vmem>>, vector<128x128xf32>
      %c0_12 = arith.constant 0 : index
      %c0_13 = arith.constant 0 : index
      %13 = vector.load %arg5[%c0_12, %c0_13] : memref<1x128xf32, #tpu.memory_space<vmem>>, vector<1x128xf32>
      %14 = vector.broadcast %13 : vector<1x128xf32> to vector<128x128xf32>
      %15 = arith.addf %12, %14 : vector<128x128xf32>
      %cst_14 = arith.constant 0.000000e+00 : f32
      %16 = vector.broadcast %cst_14 : f32 to vector<128x128xf32>
      %17 = arith.maximumf %15, %16 : vector<128x128xf32>
      %c0_15 = arith.constant 0 : index
      %c0_16 = arith.constant 0 : index
      %18 = vector.load %arg6[%c0_15, %c0_16] : memref<128x128xf32, #tpu.memory_space<vmem>>, vector<128x128xf32>
      tpu.vector_store %arg6[%c0_15, %c0_16], %17 {strides = array<i32>} : memref<128x128xf32, #tpu.memory_space<vmem>>, vector<128x128xf32>,
    } else {
    }
    return
  }
  func.func @transform_0(%arg0: i32, %arg1: i32, %arg2: i32) -> (i32, i32) {
    %c0_i32 = arith.constant 0 : i32
    return %arg0, %arg2 : i32, i32
  }
  func.func @transform_1(%arg0: i32, %arg1: i32, %arg2: i32) -> (i32, i32) {
    %c0_i32 = arith.constant 0 : i32
    return %arg2, %arg1 : i32, i32
  }
  func.func @transform_2(%arg0: i32, %arg1: i32, %arg2: i32) -> (i32, i32) {
    %c0_i32 = arith.constant 0 : i32
    %c0_i32_0 = arith.constant 0 : i32
    return %c0_i32, %arg1 : i32, i32
  }
  func.func @transform_3(%arg0: i32, %arg1: i32, %arg2: i32) -> (i32, i32) {
    %c0_i32 = arith.constant 0 : i32
    return %arg0, %arg1 : i32, i32
  }
}

</mosaic_0001>

<llo_original>
// kernel: tpu_custom_call.1
$region0: #{tpu_custom_call.1}
  #allocation0 [shape = 'u32[]', space=smem, size = 0x4, offset = 0x4, fixed_abs, tag = 'smem constant byte address 0x4 - core index']
  #allocation1 [shape = 'u32[144,128]{1,0:T(1,128)}', space=vmem, size = 0x12000, scoped, tag = 'internal scratch']
  %s0 = inlined_call_operand.hbm [shape: f32[128,896], index: 0, kind: input, shape index: {}]
  %s1 = inlined_call_operand.hbm [shape: f32[896,256], index: 1, kind: input, shape index: {}]
  %s2 = inlined_call_operand.vmem [shape: f32[1,256], index: 2, kind: input, shape index: {}]
  %s3 = inlined_call_operand.hbm [shape: f32[128,256], index: 3, kind: output, shape index: {}]
  %s4 = sld [smem:[#allocation0]]
  $region61: #{tpu_custom_call.1} parent=0
    _
  %s6 = ssub.s32 1, %s4
  %s7 = scalar_select 0, %s6, %s4
  $region1: #{tpu_custom_call.1} parent=0
    #allocation2 [shape = 'u8[458752]{0}', space=vmem, size = 0x70000, scoped, tag = 'input window, operand 0, single buffered']
    #allocation3 [shape = 's32[2]{0}', space=sflag, size = 0x8, scoped, tag = 'scoped memory for tpu_custom_call.1']
    #allocation4 [shape = 's32[2]{0}', space=sflag, size = 0x8, scoped, tag = 'scoped memory for tpu_custom_call.1']
    #allocation5 [shape = 'u8[917504]{0}', space=vmem, size = 0xe0000, scoped, tag = 'input window, operand 1']
    #allocation6 [shape = 's32[2]{0}', space=sflag, size = 0x8, scoped, tag = 'scoped memory for tpu_custom_call.1']
    #allocation7 [shape = 'u8[131072]{0}', space=vmem, size = 0x20000, scoped, tag = 'output window, operand 0']
    %8 = vsyncpa [#allocation3], 0
    %9 = vsyncpa [#allocation6], 0
    %s10 = scalar_lea.sflag [#allocation6], 1
    %11 = vsyncpa %s10, 0
    %12 = vsyncpa [#allocation4], 0
    %s13 = scalar_lea.sflag [#allocation4], 1
    %14 = vsyncpa %s13, 0
    loop: start=0, step=1, limit=4
    $region2: #{tpu_custom_call.1} parent=1 // loop_pre_header
      _
    $region3: #{tpu_custom_call.1} parent=1 // loop_header
      %s16 = sphi 0, %s20
      %p17 = scmp.ge.s32.totalorder %s16, 4
      %s23 = sphi 0, %s42
      %s24 = sphi 0, %s38
      %s25 = sphi 0, %s34
      %s26 = sphi 0, %s23
      %s27 = sphi 0, %s24
      %s28 = sphi 0, %s25
      %s29 = sphi 0, %s26
      %s30 = sphi 0, %s27
      %s31 = sphi 0, %s28
      %s47 = sphi 0, %s49
      %s50 = sphi 0, %s47
      %s51 = sphi 0, %s50
      %s67 = sphi 0, %s51
      %s75 = sphi 0, %s77
      %s78 = sphi 0, %s75
      %s79 = sphi 0, %s78
      %s95 = sphi 0, %s79
      %s101 = sphi 0, %s103
      %s104 = sphi 0, %s101
      %s105 = sphi 0, %s104
      %s121 = sphi 0, %s105
      %s129 = sphi 0, %s131
      %s132 = sphi 0, %s129
      %s133 = sphi 0, %s132
      %s149 = sphi 0, %s133
    $region4: #{tpu_custom_call.1} parent=1 // loop_header_branch
      %19 = sbr.rel (%p17) target = $region8
    $region5: #{tpu_custom_call.1} parent=1 // loop_body
      %s21 = ssub.s32 %s16, 1
      %s22 = ssub.s32 %s16, 2
      %s32 = sadd.s32 1, %s25
      %p33 = scmp.ge.s32.totalorder %s32, 1
      %s34 = scalar_select %p33, 0, %s32
      %s35 = sadd.s32 1, %s24
      %s36 = scalar_select %p33, %s35, %s24
      %p37 = scmp.ge.s32.totalorder %s36, 2
      %s38 = scalar_select %p37, 0, %s36
      %s39 = sadd.s32 1, %s23
      %s40 = scalar_select %p37, %s39, %s23
      %p41 = scmp.ge.s32.totalorder %s40, 1
      %s42 = scalar_select %p41, 0, %s40
      %s43 = ssub.s32 %s23, %s42
      %s44 = ssub.s32 %s25, %s34
      %s45 = sor.u32 %s43, %s44
      %p46 = scmp.eq.s32.totalorder %s45, 0
      %s48 = sadd.s32 %s47, 1
      %s49 = scalar_select %p46, %s47, %s48
      %p52 = pneg %p46
      %p53 = scmp.eq.s32.totalorder %s16, 1
      %p54 = por %p52, %p53
      %p55 = scmp.ne.s32.totalorder %s47, %s50
      %p56 = scmp.eq.s32.totalorder %s16, 0
      %p57 = por %p55, %p56
      %p58 = scmp.ne.s32.totalorder %s47, %s50
      %p59 = scmp.eq.s32.totalorder %s21, 1
      %p60 = por %p58, %p59
      %p61 = scmp.ne.s32.totalorder %s50, %s51
      %p62 = scmp.eq.s32.totalorder %s21, 0
      %p63 = por %p61, %p62
      %p64 = scmp.ne.s32.totalorder %s50, %s51
      %p65 = scmp.eq.s32.totalorder %s22, 1
      %p66 = por %p64, %p65
      %p68 = scmp.ne.s32.totalorder %s51, %s67
      %p69 = scmp.eq.s32.totalorder %s22, 0
      %p70 = por %p68, %p69
      %s71 = ssub.s32 %s25, %s34
      %s72 = ssub.s32 %s24, %s38
      %s73 = sor.u32 %s71, %s72
      %p74 = scmp.eq.s32.totalorder %s73, 0
      %s76 = sadd.s32 %s75, 1
      %s77 = scalar_select %p74, %s75, %s76
      %p80 = pneg %p74
      %p81 = scmp.eq.s32.totalorder %s16, 1
      %p82 = por %p80, %p81
      %p83 = scmp.ne.s32.totalorder %s75, %s78
      %p84 = scmp.eq.s32.totalorder %s16, 0
      %p85 = por %p83, %p84
      %p86 = scmp.ne.s32.totalorder %s75, %s78
      %p87 = scmp.eq.s32.totalorder %s21, 1
      %p88 = por %p86, %p87
      %p89 = scmp.ne.s32.totalorder %s78, %s79
      %p90 = scmp.eq.s32.totalorder %s21, 0
      %p91 = por %p89, %p90
      %p92 = scmp.ne.s32.totalorder %s78, %s79
      %p93 = scmp.eq.s32.totalorder %s22, 1
      %p94 = por %p92, %p93
      %p96 = scmp.ne.s32.totalorder %s79, %s95
      %p97 = scmp.eq.s32.totalorder %s22, 0
      %p98 = por %p96, %p97
      %s99 = ssub.s32 %s24, %s38
      %p100 = scmp.eq.s32.totalorder %s99, 0
      %s102 = sadd.s32 %s101, 1
      %s103 = scalar_select %p100, %s101, %s102
      %p106 = pneg %p100
      %p107 = scmp.eq.s32.totalorder %s16, 1
      %p108 = por %p106, %p107
      %p109 = scmp.ne.s32.totalorder %s101, %s104
      %p110 = scmp.eq.s32.totalorder %s16, 0
      %p111 = por %p109, %p110
      %p112 = scmp.ne.s32.totalorder %s101, %s104
      %p113 = scmp.eq.s32.totalorder %s21, 1
      %p114 = por %p112, %p113
      %p115 = scmp.ne.s32.totalorder %s104, %s105
      %p116 = scmp.eq.s32.totalorder %s21, 0
      %p117 = por %p115, %p116
      %p118 = scmp.ne.s32.totalorder %s104, %s105
      %p119 = scmp.eq.s32.totalorder %s22, 1
      %p120 = por %p118, %p119
      %p122 = scmp.ne.s32.totalorder %s105, %s121
      %p123 = scmp.eq.s32.totalorder %s22, 0
      %p124 = por %p122, %p123
      %s125 = ssub.s32 %s23, %s42
      %s126 = ssub.s32 %s24, %s38
      %s127 = sor.u32 %s125, %s126
      %p128 = scmp.eq.s32.totalorder %s127, 0
      %s130 = sadd.s32 %s129, 1
      %s131 = scalar_select %p128, %s129, %s130
      %p134 = pneg %p128
      %p135 = scmp.eq.s32.totalorder %s16, 1
      %p136 = por %p134, %p135
      %p137 = scmp.ne.s32.totalorder %s129, %s132
      %p138 = scmp.eq.s32.totalorder %s16, 0
      %p139 = por %p137, %p138
      %p140 = scmp.ne.s32.totalorder %s129, %s132
      %p141 = scmp.eq.s32.totalorder %s21, 1
      %p142 = por %p140, %p141
      %p143 = scmp.ne.s32.totalorder %s132, %s133
      %p144 = scmp.eq.s32.totalorder %s21, 0
      %p145 = por %p143, %p144
      %p146 = scmp.ne.s32.totalorder %s132, %s133
      %p147 = scmp.eq.s32.totalorder %s22, 1
      %p148 = por %p146, %p147
      %p150 = scmp.ne.s32.totalorder %s133, %s149
      %p151 = scmp.eq.s32.totalorder %s22, 0
      %p152 = por %p150, %p151
      %p153 = scmp.le.s32.totalorder 1, %s16
      %p154 = scmp.lt.s32.totalorder %s16, 3
      %p155 = pnand %p153, %p154
      %p156 = pneg %p155
      // Predicated region
      $region9: #{tpu_custom_call.1} parent=5 // pred_check
        _
      $region10: #{tpu_custom_call.1} parent=5 // pred_check_branch
        %158 = sbr.rel (%p155) target = $region12
      $region11: #{tpu_custom_call.1} parent=5 // pred_region
        %s159 = ssub.s32 %s16, 1
        // Predicated region
        $region13: #{tpu_custom_call.1} parent=11 // pred_check
          %p160 = pneg %p63
        $region14: #{tpu_custom_call.1} parent=11 // pred_check_branch
          %162 = sbr.rel (%p160) target = $region16
        $region15: #{tpu_custom_call.1} parent=11 // pred_region
          %s163 = smul.u32 16, %s26
          %s164 = smul.u32 7, %s28
          %s166 = ssub.s32 14336, 14336
          %167 = vsyncadd [#allocation3], %s166
          %s168 = smul.addr %s163, 7
          %s169 = sadd.s32 %s164, %s168
          %s170 = smul.addr %s169, 128
          %s171 = scalar_lea.hbm %s0, %s170
          %s172 = sshll.u32 [#allocation2], 4
          %s173 = int_to_ptr.vmem [resolvable:$true] %s172
          %178 = dma.hbm_to_vmem [thread:$0]  %s171, 14336, %s173, [#allocation3], 896, 896, 56
        $region16: #{tpu_custom_call.1} parent=11 // pred_fallthru
          _
      $region12: #{tpu_custom_call.1} parent=5 // pred_fallthru
        _
      %p179 = scmp.lt.s32.totalorder %s16, 2
      // Predicated region
      $region17: #{tpu_custom_call.1} parent=5 // pred_check
        %p180 = pneg %p179
      $region18: #{tpu_custom_call.1} parent=5 // pred_check_branch
        %182 = sbr.rel (%p180) target = $region20
      $region19: #{tpu_custom_call.1} parent=5 // pred_region
        // Predicated region
        $region21: #{tpu_custom_call.1} parent=19 // pred_check
          %p183 = pneg %p85
        $region22: #{tpu_custom_call.1} parent=19 // pred_check_branch
          %185 = sbr.rel (%p183) target = $region24
        $region23: #{tpu_custom_call.1} parent=19 // pred_region
          %s186 = sand.u32 %s75, 1
          %s187 = scalar_lea.sflag [#allocation6], %s186
          %s188 = sand.u32 %s75, 1
          %s189 = smul.addr %s188, 896
          %s190 = scalar_lea.vmem [#allocation5], %s189
          %s191 = smul.u32 112, %s25
          %s193 = ssub.s32 14336, 14336
          %194 = vsyncadd %s187, %s193
          %s195 = smul.addr %s191, 2
          %s196 = sadd.s32 %s24, %s195
          %s197 = smul.addr %s196, 128
          %s198 = scalar_lea.hbm %s1, %s197
          %s199 = sshll.u32 %s190, 4
          %s200 = int_to_ptr.vmem [resolvable:$true] %s199
          %205 = dma.hbm_to_vmem [thread:$0]  %s198, 14336, %s200, %s187, 256, 128, 8
        $region24: #{tpu_custom_call.1} parent=19 // pred_fallthru
          _
        // Predicated region
        $region25: #{tpu_custom_call.1} parent=19 // pred_check
          %p206 = pneg %p111
        $region26: #{tpu_custom_call.1} parent=19 // pred_check_branch
          %208 = sbr.rel (%p206) target = $region28
        $region27: #{tpu_custom_call.1} parent=19 // pred_region
          %p209 = scmp.lt.s32.totalorder %s24, 1
          %s210 = scalar_select %p209, %s24, 1
          %s211 = scalar_lea.vmem %s2, %s210
        $region28: #{tpu_custom_call.1} parent=19 // pred_fallthru
          _
      $region20: #{tpu_custom_call.1} parent=5 // pred_fallthru
        _
      %p212 = scmp.le.s32.totalorder 1, %s16
      %p213 = scmp.lt.s32.totalorder %s16, 3
      %p214 = pnand %p212, %p213
      %p215 = pneg %p214
      // Predicated region
      $region29: #{tpu_custom_call.1} parent=5 // pred_check
        _
      $region30: #{tpu_custom_call.1} parent=5 // pred_check_branch
        %217 = sbr.rel (%p214) target = $region32
      $region31: #{tpu_custom_call.1} parent=5 // pred_region
        %s218 = ssub.s32 %s16, 1
        // Predicated region
        $region33: #{tpu_custom_call.1} parent=31 // pred_check
          %p219 = pneg %p63
        $region34: #{tpu_custom_call.1} parent=31 // pred_check_branch
          %221 = sbr.rel (%p219) target = $region36
        $region35: #{tpu_custom_call.1} parent=31 // pred_region
          %222 = dma.done [#allocation3], 14336
        $region36: #{tpu_custom_call.1} parent=31 // pred_fallthru
          _
        %s223 = sand.u32 %s78, 1
        %s224 = scalar_lea.sflag [#allocation6], %s223
        %s225 = sand.u32 %s78, 1
        %s226 = smul.addr %s225, 896
        %s227 = scalar_lea.vmem [#allocation5], %s226
        // Predicated region
        $region37: #{tpu_custom_call.1} parent=31 // pred_check
          %p228 = pneg %p91
        $region38: #{tpu_custom_call.1} parent=31 // pred_check_branch
          %230 = sbr.rel (%p228) target = $region40
        $region39: #{tpu_custom_call.1} parent=31 // pred_region
          %231 = dma.done %s224, 14336
        $region40: #{tpu_custom_call.1} parent=31 // pred_fallthru
          _
        %p232 = pneg %p63
        %p233 = pneg %p60
        %s234 = sand.u32 %s78, 1
        %s235 = scalar_lea.sflag [#allocation6], %s234
        %s236 = sand.u32 %s78, 1
        %s237 = smul.addr %s236, 896
        %s238 = scalar_lea.vmem [#allocation5], %s237
        %p239 = pneg %p91
        %p240 = pneg %p88
        %p241 = scmp.lt.s32.totalorder %s27, 1
        %s242 = scalar_select %p241, %s27, 1
        %s243 = scalar_lea.vmem %s2, %s242
        %p244 = pneg %p117
        %p245 = pneg %p114
        %p246 = pneg %p145
        %p247 = pneg %p142
        %s248 = sand.u32 %s132, 1
        %s249 = scalar_lea.sflag [#allocation4], %s248
        %s250 = sand.u32 %s132, 1
        %s251 = smul.addr %s250, 128
        %s252 = scalar_lea.vmem [#allocation7], %s251
        %s253 = smul.u32 16, %s26
        %s254 = smul.u32 7, %s28
        %s255 = smul.u32 112, %s28
        %p256 = scmp.lt.s32.totalorder %s27, 1
        %s257 = scalar_select %p256, %s27, 1
        %s258 = scalar_lea.vmem %s2, %s257
        %s259 = smul.u32 16, %s26
        %p260 = scmp.eq.s32.totalorder %s28, 0
        // Predicated region
        $region41: #{tpu_custom_call.1} parent=31 // pred_check
          %p261 = pneg %p260
        $region42: #{tpu_custom_call.1} parent=31 // pred_check_branch
          %263 = sbr.rel (%p261) target = $region44
        $region43: #{tpu_custom_call.1} parent=31 // pred_region
          %264 = vst [vmem:[%s252] sm:$0xff] 0.0
          %265 = vst [vmem:[%s252 + $0x8] sm:$0xff] 0.0
          %266 = vst [vmem:[%s252 + $0x10] sm:$0xff] 0.0
          %267 = vst [vmem:[%s252 + $0x18] sm:$0xff] 0.0
          %268 = vst [vmem:[%s252 + $0x20] sm:$0xff] 0.0
          %269 = vst [vmem:[%s252 + $0x28] sm:$0xff] 0.0
          %270 = vst [vmem:[%s252 + $0x30] sm:$0xff] 0.0
          %271 = vst [vmem:[%s252 + $0x38] sm:$0xff] 0.0
          %272 = vst [vmem:[%s252 + $0x40] sm:$0xff] 0.0
          %273 = vst [vmem:[%s252 + $0x48] sm:$0xff] 0.0
          %274 = vst [vmem:[%s252 + $0x50] sm:$0xff] 0.0
          %275 = vst [vmem:[%s252 + $0x58] sm:$0xff] 0.0
          %276 = vst [vmem:[%s252 + $0x60] sm:$0xff] 0.0
          %277 = vst [vmem:[%s252 + $0x68] sm:$0xff] 0.0
          %278 = vst [vmem:[%s252 + $0x70] sm:$0xff] 0.0
          %279 = vst [vmem:[%s252 + $0x78] sm:$0xff] 0.0
        $region44: #{tpu_custom_call.1} parent=31 // pred_fallthru
          _
        %v280 = vld [vmem:[%s252] sm:$0xff]
        %v281 = vld [vmem:[%s252 + $0x8] sm:$0xff]
        %v282 = vld [vmem:[%s252 + $0x10] sm:$0xff]
        %v283 = vld [vmem:[%s252 + $0x18] sm:$0xff]
        %v284 = vld [vmem:[%s252 + $0x20] sm:$0xff]
        %v285 = vld [vmem:[%s252 + $0x28] sm:$0xff]
        %v286 = vld [vmem:[%s252 + $0x30] sm:$0xff]
        %v287 = vld [vmem:[%s252 + $0x38] sm:$0xff]
        %v288 = vld [vmem:[%s252 + $0x40] sm:$0xff]
        %v289 = vld [vmem:[%s252 + $0x48] sm:$0xff]
        %v290 = vld [vmem:[%s252 + $0x50] sm:$0xff]
        %v291 = vld [vmem:[%s252 + $0x58] sm:$0xff]
        %v292 = vld [vmem:[%s252 + $0x60] sm:$0xff]
        %v293 = vld [vmem:[%s252 + $0x68] sm:$0xff]
        %v294 = vld [vmem:[%s252 + $0x70] sm:$0xff]
        %v295 = vld [vmem:[%s252 + $0x78] sm:$0xff]
        %v296 = vld [vmem:[#allocation2] sm:$0xff]
        %v297 = vld [vmem:[#allocation2 + $0x8] sm:$0xff]
        %v298 = vld [vmem:[#allocation2 + $0x10] sm:$0xff]
        %v299 = vld [vmem:[#allocation2 + $0x18] sm:$0xff]
        %v300 = vld [vmem:[#allocation2 + $0x20] sm:$0xff]
        %v301 = vld [vmem:[#allocation2 + $0x28] sm:$0xff]
        %v302 = vld [vmem:[#allocation2 + $0x30] sm:$0xff]
        %v303 = vld [vmem:[#allocation2 + $0x38] sm:$0xff]
        %v304 = vld [vmem:[#allocation2 + $0x40] sm:$0xff]
        %v305 = vld [vmem:[#allocation2 + $0x48] sm:$0xff]
        %v306 = vld [vmem:[#allocation2 + $0x50] sm:$0xff]
        %v307 = vld [vmem:[#allocation2 + $0x58] sm:$0xff]
        %v308 = vld [vmem:[#allocation2 + $0x60] sm:$0xff]
        %v309 = vld [vmem:[#allocation2 + $0x68] sm:$0xff]
        %v310 = vld [vmem:[#allocation2 + $0x70] sm:$0xff]
        %v311 = vld [vmem:[#allocation2 + $0x78] sm:$0xff]
        %v312 = vld [vmem:[#allocation2 + $0x80] sm:$0xff]
        %v313 = vld [vmem:[#allocation2 + $0x88] sm:$0xff]
        %v314 = vld [vmem:[#allocation2 + $0x90] sm:$0xff]
        %v315 = vld [vmem:[#allocation2 + $0x98] sm:$0xff]
        %v316 = vld [vmem:[#allocation2 + $0xa0] sm:$0xff]
        %v317 = vld [vmem:[#allocation2 + $0xa8] sm:$0xff]
        %v318 = vld [vmem:[#allocation2 + $0xb0] sm:$0xff]
        %v319 = vld [vmem:[#allocation2 + $0xb8] sm:$0xff]
        %v320 = vld [vmem:[#allocation2 + $0xc0] sm:$0xff]
        %v321 = vld [vmem:[#allocation2 + $0xc8] sm:$0xff]
        %v322 = vld [vmem:[#allocation2 + $0xd0] sm:$0xff]
        %v323 = vld [vmem:[#allocation2 + $0xd8] sm:$0xff]
        %v324 = vld [vmem:[#allocation2 + $0xe0] sm:$0xff]
        %v325 = vld [vmem:[#allocation2 + $0xe8] sm:$0xff]
        %v326 = vld [vmem:[#allocation2 + $0xf0] sm:$0xff]
        %v327 = vld [vmem:[#allocation2 + $0xf8] sm:$0xff]
        %v328 = vld [vmem:[#allocation2 + $0x100] sm:$0xff]
        %v329 = vld [vmem:[#allocation2 + $0x108] sm:$0xff]
        %v330 = vld [vmem:[#allocation2 + $0x110] sm:$0xff]
        %v331 = vld [vmem:[#allocation2 + $0x118] sm:$0xff]
        %v332 = vld [vmem:[#allocation2 + $0x120] sm:$0xff]
        %v333 = vld [vmem:[#allocation2 + $0x128] sm:$0xff]
        %v334 = vld [vmem:[#allocation2 + $0x130] sm:$0xff]
        %v335 = vld [vmem:[#allocation2 + $0x138] sm:$0xff]
        %v336 = vld [vmem:[#allocation2 + $0x140] sm:$0xff]
        %v337 = vld [vmem:[#allocation2 + $0x148] sm:$0xff]
        %v338 = vld [vmem:[#allocation2 + $0x150] sm:$0xff]
        %v339 = vld [vmem:[#allocation2 + $0x158] sm:$0xff]
        %v340 = vld [vmem:[#allocation2 + $0x160] sm:$0xff]
        %v341 = vld [vmem:[#allocation2 + $0x168] sm:$0xff]
        %v342 = vld [vmem:[#allocation2 + $0x170] sm:$0xff]
        %v343 = vld [vmem:[#allocation2 + $0x178] sm:$0xff]
        %v344 = vld [vmem:[#allocation2 + $0x180] sm:$0xff]
        %v345 = vld [vmem:[#allocation2 + $0x188] sm:$0xff]
        %v346 = vld [vmem:[#allocation2 + $0x190] sm:$0xff]
        %v347 = vld [vmem:[#allocation2 + $0x198] sm:$0xff]
        %v348 = vld [vmem:[#allocation2 + $0x1a0] sm:$0xff]
        %v349 = vld [vmem:[#allocation2 + $0x1a8] sm:$0xff]
        %v350 = vld [vmem:[#allocation2 + $0x1b0] sm:$0xff]
        %v351 = vld [vmem:[#allocation2 + $0x1b8] sm:$0xff]
        %v352 = vld [vmem:[#allocation2 + $0x1c0] sm:$0xff]
        %v353 = vld [vmem:[#allocation2 + $0x1c8] sm:$0xff]
        %v354 = vld [vmem:[#allocation2 + $0x1d0] sm:$0xff]
        %v355 = vld [vmem:[#allocation2 + $0x1d8] sm:$0xff]
        %v356 = vld [vmem:[#allocation2 + $0x1e0] sm:$0xff]
        %v357 = vld [vmem:[#allocation2 + $0x1e8] sm:$0xff]
        %v358 = vld [vmem:[#allocation2 + $0x1f0] sm:$0xff]
        %v359 = vld [vmem:[#allocation2 + $0x1f8] sm:$0xff]
        %v360 = vld [vmem:[#allocation2 + $0x200] sm:$0xff]
        %v361 = vld [vmem:[#allocation2 + $0x208] sm:$0xff]
        %v362 = vld [vmem:[#allocation2 + $0x210] sm:$0xff]
        %v363 = vld [vmem:[#allocation2 + $0x218] sm:$0xff]
        %v364 = vld [vmem:[#allocation2 + $0x220] sm:$0xff]
        %v365 = vld [vmem:[#allocation2 + $0x228] sm:$0xff]
        %v366 = vld [vmem:[#allocation2 + $0x230] sm:$0xff]
        %v367 = vld [vmem:[#allocation2 + $0x238] sm:$0xff]
        %v368 = vld [vmem:[#allocation2 + $0x240] sm:$0xff]
        %v369 = vld [vmem:[#allocation2 + $0x248] sm:$0xff]
        %v370 = vld [vmem:[#allocation2 + $0x250] sm:$0xff]
        %v371 = vld [vmem:[#allocation2 + $0x258] sm:$0xff]
        %v372 = vld [vmem:[#allocation2 + $0x260] sm:$0xff]
        %v373 = vld [vmem:[#allocation2 + $0x268] sm:$0xff]
        %v374 = vld [vmem:[#allocation2 + $0x270] sm:$0xff]
        %v375 = vld [vmem:[#allocation2 + $0x278] sm:$0xff]
        %v376 = vld [vmem:[#allocation2 + $0x280] sm:$0xff]
        %v377 = vld [vmem:[#allocation2 + $0x288] sm:$0xff]
        %v378 = vld [vmem:[#allocation2 + $0x290] sm:$0xff]
        %v379 = vld [vmem:[#allocation2 + $0x298] sm:$0xff]
        %v380 = vld [vmem:[#allocation2 + $0x2a0] sm:$0xff]
        %v381 = vld [vmem:[#allocation2 + $0x2a8] sm:$0xff]
        %v382 = vld [vmem:[#allocation2 + $0x2b0] sm:$0xff]
        %v383 = vld [vmem:[#allocation2 + $0x2b8] sm:$0xff]
        %v384 = vld [vmem:[#allocation2 + $0x2c0] sm:$0xff]
        %v385 = vld [vmem:[#allocation2 + $0x2c8] sm:$0xff]
        %v386 = vld [vmem:[#allocation2 + $0x2d0] sm:$0xff]
        %v387 = vld [vmem:[#allocation2 + $0x2d8] sm:$0xff]
        %v388 = vld [vmem:[#allocation2 + $0x2e0] sm:$0xff]
        %v389 = vld [vmem:[#allocation2 + $0x2e8] sm:$0xff]
        %v390 = vld [vmem:[#allocation2 + $0x2f0] sm:$0xff]
        %v391 = vld [vmem:[#allocation2 + $0x2f8] sm:$0xff]
        %v392 = vld [vmem:[#allocation2 + $0x300] sm:$0xff]
        %v393 = vld [vmem:[#allocation2 + $0x308] sm:$0xff]
        %v394 = vld [vmem:[#allocation2 + $0x310] sm:$0xff]
        %v395 = vld [vmem:[#allocation2 + $0x318] sm:$0xff]
        %v396 = vld [vmem:[#allocation2 + $0x320] sm:$0xff]
        %v397 = vld [vmem:[#allocation2 + $0x328] sm:$0xff]
        %v398 = vld [vmem:[#allocation2 + $0x330] sm:$0xff]
        %v399 = vld [vmem:[#allocation2 + $0x338] sm:$0xff]
        %v400 = vld [vmem:[#allocation2 + $0x340] sm:$0xff]
        %v401 = vld [vmem:[#allocation2 + $0x348] sm:$0xff]
        %v402 = vld [vmem:[#allocation2 + $0x350] sm:$0xff]
        %v403 = vld [vmem:[#allocation2 + $0x358] sm:$0xff]
        %v404 = vld [vmem:[#allocation2 + $0x360] sm:$0xff]
        %v405 = vld [vmem:[#allocation2 + $0x368] sm:$0xff]
        %v406 = vld [vmem:[#allocation2 + $0x370] sm:$0xff]
        %v407 = vld [vmem:[#allocation2 + $0x378] sm:$0xff]
        %v408 = vld [vmem:[%s227] sm:$0xff]
        %v409 = vld [vmem:[%s227 + $0x8] sm:$0xff]
        %v410 = vld [vmem:[%s227 + $0x10] sm:$0xff]
        %v411 = vld [vmem:[%s227 + $0x18] sm:$0xff]
        %v412 = vld [vmem:[%s227 + $0x20] sm:$0xff]
        %v413 = vld [vmem:[%s227 + $0x28] sm:$0xff]
        %v414 = vld [vmem:[%s227 + $0x30] sm:$0xff]
        %v415 = vld [vmem:[%s227 + $0x38] sm:$0xff]
        %v416 = vld [vmem:[%s227 + $0x40] sm:$0xff]
        %v417 = vld [vmem:[%s227 + $0x48] sm:$0xff]
        %v418 = vld [vmem:[%s227 + $0x50] sm:$0xff]
        %v419 = vld [vmem:[%s227 + $0x58] sm:$0xff]
        %v420 = vld [vmem:[%s227 + $0x60] sm:$0xff]
        %v421 = vld [vmem:[%s227 + $0x68] sm:$0xff]
        %v422 = vld [vmem:[%s227 + $0x70] sm:$0xff]
        %v423 = vld [vmem:[%s227 + $0x78] sm:$0xff]
        %v424 = vld [vmem:[%s227 + $0x80] sm:$0xff]
        %v425 = vld [vmem:[%s227 + $0x88] sm:$0xff]
        %v426 = vld [vmem:[%s227 + $0x90] sm:$0xff]
        %v427 = vld [vmem:[%s227 + $0x98] sm:$0xff]
        %v428 = vld [vmem:[%s227 + $0xa0] sm:$0xff]
        %v429 = vld [vmem:[%s227 + $0xa8] sm:$0xff]
        %v430 = vld [vmem:[%s227 + $0xb0] sm:$0xff]
        %v431 = vld [vmem:[%s227 + $0xb8] sm:$0xff]
        %v432 = vld [vmem:[%s227 + $0xc0] sm:$0xff]
        %v433 = vld [vmem:[%s227 + $0xc8] sm:$0xff]
        %v434 = vld [vmem:[%s227 + $0xd0] sm:$0xff]
        %v435 = vld [vmem:[%s227 + $0xd8] sm:$0xff]
        %v436 = vld [vmem:[%s227 + $0xe0] sm:$0xff]
        %v437 = vld [vmem:[%s227 + $0xe8] sm:$0xff]
        %v438 = vld [vmem:[%s227 + $0xf0] sm:$0xff]
        %v439 = vld [vmem:[%s227 + $0xf8] sm:$0xff]
        %v440 = vld [vmem:[%s227 + $0x100] sm:$0xff]
        %v441 = vld [vmem:[%s227 + $0x108] sm:$0xff]
        %v442 = vld [vmem:[%s227 + $0x110] sm:$0xff]
        %v443 = vld [vmem:[%s227 + $0x118] sm:$0xff]
        %v444 = vld [vmem:[%s227 + $0x120] sm:$0xff]
        %v445 = vld [vmem:[%s227 + $0x128] sm:$0xff]
        %v446 = vld [vmem:[%s227 + $0x130] sm:$0xff]
        %v447 = vld [vmem:[%s227 + $0x138] sm:$0xff]
        %v448 = vld [vmem:[%s227 + $0x140] sm:$0xff]
        %v449 = vld [vmem:[%s227 + $0x148] sm:$0xff]
        %v450 = vld [vmem:[%s227 + $0x150] sm:$0xff]
        %v451 = vld [vmem:[%s227 + $0x158] sm:$0xff]
        %v452 = vld [vmem:[%s227 + $0x160] sm:$0xff]
        %v453 = vld [vmem:[%s227 + $0x168] sm:$0xff]
        %v454 = vld [vmem:[%s227 + $0x170] sm:$0xff]
        %v455 = vld [vmem:[%s227 + $0x178] sm:$0xff]
        %v456 = vld [vmem:[%s227 + $0x180] sm:$0xff]
        %v457 = vld [vmem:[%s227 + $0x188] sm:$0xff]
        %v458 = vld [vmem:[%s227 + $0x190] sm:$0xff]
        %v459 = vld [vmem:[%s227 + $0x198] sm:$0xff]
        %v460 = vld [vmem:[%s227 + $0x1a0] sm:$0xff]
        %v461 = vld [vmem:[%s227 + $0x1a8] sm:$0xff]
        %v462 = vld [vmem:[%s227 + $0x1b0] sm:$0xff]
        %v463 = vld [vmem:[%s227 + $0x1b8] sm:$0xff]
        %v464 = vld [vmem:[%s227 + $0x1c0] sm:$0xff]
        %v465 = vld [vmem:[%s227 + $0x1c8] sm:$0xff]
        %v466 = vld [vmem:[%s227 + $0x1d0] sm:$0xff]
        %v467 = vld [vmem:[%s227 + $0x1d8] sm:$0xff]
        %v468 = vld [vmem:[%s227 + $0x1e0] sm:$0xff]
        %v469 = vld [vmem:[%s227 + $0x1e8] sm:$0xff]
        %v470 = vld [vmem:[%s227 + $0x1f0] sm:$0xff]
        %v471 = vld [vmem:[%s227 + $0x1f8] sm:$0xff]
        %v472 = vld [vmem:[%s227 + $0x200] sm:$0xff]
        %v473 = vld [vmem:[%s227 + $0x208] sm:$0xff]
        %v474 = vld [vmem:[%s227 + $0x210] sm:$0xff]
        %v475 = vld [vmem:[%s227 + $0x218] sm:$0xff]
        %v476 = vld [vmem:[%s227 + $0x220] sm:$0xff]
        %v477 = vld [vmem:[%s227 + $0x228] sm:$0xff]
        %v478 = vld [vmem:[%s227 + $0x230] sm:$0xff]
        %v479 = vld [vmem:[%s227 + $0x238] sm:$0xff]
        %v480 = vld [vmem:[%s227 + $0x240] sm:$0xff]
        %v481 = vld [vmem:[%s227 + $0x248] sm:$0xff]
        %v482 = vld [vmem:[%s227 + $0x250] sm:$0xff]
        %v483 = vld [vmem:[%s227 + $0x258] sm:$0xff]
        %v484 = vld [vmem:[%s227 + $0x260] sm:$0xff]
        %v485 = vld [vmem:[%s227 + $0x268] sm:$0xff]
        %v486 = vld [vmem:[%s227 + $0x270] sm:$0xff]
        %v487 = vld [vmem:[%s227 + $0x278] sm:$0xff]
        %v488 = vld [vmem:[%s227 + $0x280] sm:$0xff]
        %v489 = vld [vmem:[%s227 + $0x288] sm:$0xff]
        %v490 = vld [vmem:[%s227 + $0x290] sm:$0xff]
        %v491 = vld [vmem:[%s227 + $0x298] sm:$0xff]
        %v492 = vld [vmem:[%s227 + $0x2a0] sm:$0xff]
        %v493 = vld [vmem:[%s227 + $0x2a8] sm:$0xff]
        %v494 = vld [vmem:[%s227 + $0x2b0] sm:$0xff]
        %v495 = vld [vmem:[%s227 + $0x2b8] sm:$0xff]
        %v496 = vld [vmem:[%s227 + $0x2c0] sm:$0xff]
        %v497 = vld [vmem:[%s227 + $0x2c8] sm:$0xff]
        %v498 = vld [vmem:[%s227 + $0x2d0] sm:$0xff]
        %v499 = vld [vmem:[%s227 + $0x2d8] sm:$0xff]
        %v500 = vld [vmem:[%s227 + $0x2e0] sm:$0xff]
        %v501 = vld [vmem:[%s227 + $0x2e8] sm:$0xff]
        %v502 = vld [vmem:[%s227 + $0x2f0] sm:$0xff]
        %v503 = vld [vmem:[%s227 + $0x2f8] sm:$0xff]
        %v504 = vld [vmem:[%s227 + $0x300] sm:$0xff]
        %v505 = vld [vmem:[%s227 + $0x308] sm:$0xff]
        %v506 = vld [vmem:[%s227 + $0x310] sm:$0xff]
        %v507 = vld [vmem:[%s227 + $0x318] sm:$0xff]
        %v508 = vld [vmem:[%s227 + $0x320] sm:$0xff]
        %v509 = vld [vmem:[%s227 + $0x328] sm:$0xff]
        %v510 = vld [vmem:[%s227 + $0x330] sm:$0xff]
        %v511 = vld [vmem:[%s227 + $0x338] sm:$0xff]
        %v512 = vld [vmem:[%s227 + $0x340] sm:$0xff]
        %v513 = vld [vmem:[%s227 + $0x348] sm:$0xff]
        %v514 = vld [vmem:[%s227 + $0x350] sm:$0xff]
        %v515 = vld [vmem:[%s227 + $0x358] sm:$0xff]
        %v516 = vld [vmem:[%s227 + $0x360] sm:$0xff]
        %v517 = vld [vmem:[%s227 + $0x368] sm:$0xff]
        %v518 = vld [vmem:[%s227 + $0x370] sm:$0xff]
        %v519 = vld [vmem:[%s227 + $0x378] sm:$0xff]
        %520 = vmatprep.subr.mxu0 0.0
        %521 = vmatpush1.msra.mxu0 %v423
        %522 = vmatprep.subr.mxu0 0.0
        %523 = vmatpush1.msra.mxu0 %v422
        %524 = vmatprep.subr.mxu0 0.0
        %525 = vmatpush1.msra.mxu0 %v421
        %526 = vmatprep.subr.mxu0 0.0
        %527 = vmatpush1.msra.mxu0 %v420
        %528 = vmatprep.subr.mxu0 0.0
        %529 = vmatpush1.msra.mxu0 %v419
        %530 = vmatprep.subr.mxu0 0.0
        %531 = vmatpush1.msra.mxu0 %v418
        %532 = vmatprep.subr.mxu0 0.0
        %533 = vmatpush1.msra.mxu0 %v417
        %534 = vmatprep.subr.mxu0 0.0
        %535 = vmatpush1.msra.mxu0 %v416
        %536 = vmatprep.subr.mxu0 0.0
        %537 = vmatpush1.msra.mxu0 %v415
        %538 = vmatprep.subr.mxu0 0.0
        %539 = vmatpush1.msra.mxu0 %v414
        %540 = vmatprep.subr.mxu0 0.0
        %541 = vmatpush1.msra.mxu0 %v413
        %542 = vmatprep.subr.mxu0 0.0
        %543 = vmatpush1.msra.mxu0 %v412
        %544 = vmatprep.subr.mxu0 0.0
        %545 = vmatpush1.msra.mxu0 %v411
        %546 = vmatprep.subr.mxu0 0.0
        %547 = vmatpush1.msra.mxu0 %v410
        %548 = vmatprep.subr.mxu0 0.0
        %549 = vmatpush1.msra.mxu0 %v409
        %550 = vmatprep.subr.mxu0 0.0
        %551 = vmatpush1.msra.mxu0 %v408
        %552 = vmatprep.subr.mxu0 0.0
        %553 = vmatpush2.msra.mxu0 %v439
        %554 = vmatprep.subr.mxu0 0.0
        %555 = vmatpush2.msra.mxu0 %v438
        %556 = vmatprep.subr.mxu0 0.0
        %557 = vmatpush2.msra.mxu0 %v437
        %558 = vmatprep.subr.mxu0 0.0
        %559 = vmatpush2.msra.mxu0 %v436
        %560 = vmatprep.subr.mxu0 0.0
        %561 = vmatpush2.msra.mxu0 %v435
        %562 = vmatprep.subr.mxu0 0.0
        %563 = vmatpush2.msra.mxu0 %v434
        %564 = vmatprep.subr.mxu0 0.0
        %565 = vmatpush2.msra.mxu0 %v433
        %566 = vmatprep.subr.mxu0 0.0
        %567 = vmatpush2.msra.mxu0 %v432
        %568 = vmatprep.subr.mxu0 0.0
        %569 = vmatpush2.msra.mxu0 %v431
        %570 = vmatprep.subr.mxu0 0.0
        %571 = vmatpush2.msra.mxu0 %v430
        %572 = vmatprep.subr.mxu0 0.0
        %573 = vmatpush2.msra.mxu0 %v429
        %574 = vmatprep.subr.mxu0 0.0
        %575 = vmatpush2.msra.mxu0 %v428
        %576 = vmatprep.subr.mxu0 0.0
        %577 = vmatpush2.msra.mxu0 %v427
        %578 = vmatprep.subr.mxu0 0.0
        %579 = vmatpush2.msra.mxu0 %v426
        %580 = vmatprep.subr.mxu0 0.0
        %581 = vmatpush2.msra.mxu0 %v425
        %582 = vmatprep.subr.mxu0 0.0
        %583 = vmatpush2.msra.mxu0 %v424
        %584 = vmatprep.mubr.f32.mxu0 %v297
        %585 = vmatmul.mubr.f32.gmra.mxu0 %v296
        %v586 = vpop.f32.mrf.mxu0
        %v587 = vadd.f32 0.0, %v586
        %v588 = vpop.f32.mrf.mxu0
        %589 = vmatprep.mubr.f32.mxu0 %v304
        %590 = vmatmul.mubr.f32.gmra.mxu0 %v303
        %v591 = vpop.f32.mrf.mxu0
        %v592 = vadd.f32 0.0, %v591
        %v593 = vpop.f32.mrf.mxu0
        %594 = vmatprep.mubr.f32.mxu0 %v311
        %595 = vmatmul.mubr.f32.gmra.mxu0 %v310
        %v596 = vpop.f32.mrf.mxu0
        %v597 = vadd.f32 0.0, %v596
        %v598 = vpop.f32.mrf.mxu0
        %599 = vmatprep.mubr.f32.mxu0 %v318
        %600 = vmatmul.mubr.f32.gmra.mxu0 %v317
        %v601 = vpop.f32.mrf.mxu0
        %v602 = vadd.f32 0.0, %v601
        %v603 = vpop.f32.mrf.mxu0
        %604 = vmatprep.mubr.f32.mxu0 %v325
        %605 = vmatmul.mubr.f32.gmra.mxu0 %v324
        %v606 = vpop.f32.mrf.mxu0
        %v607 = vadd.f32 0.0, %v606
        %v608 = vpop.f32.mrf.mxu0
        %609 = vmatprep.mubr.f32.mxu0 %v332
        %610 = vmatmul.mubr.f32.gmra.mxu0 %v331
        %v611 = vpop.f32.mrf.mxu0
        %v612 = vadd.f32 0.0, %v611
        %v613 = vpop.f32.mrf.mxu0
        %614 = vmatprep.mubr.f32.mxu0 %v339
        %615 = vmatmul.mubr.f32.gmra.mxu0 %v338
        %v616 = vpop.f32.mrf.mxu0
        %v617 = vadd.f32 0.0, %v616
        %v618 = vpop.f32.mrf.mxu0
        %619 = vmatprep.mubr.f32.mxu0 %v346
        %620 = vmatmul.mubr.f32.gmra.mxu0 %v345
        %v621 = vpop.f32.mrf.mxu0
        %v622 = vadd.f32 0.0, %v621
        %v623 = vpop.f32.mrf.mxu0
        %624 = vmatprep.mubr.f32.mxu0 %v353
        %625 = vmatmul.mubr.f32.gmra.mxu0 %v352
        %v626 = vpop.f32.mrf.mxu0
        %v627 = vadd.f32 0.0, %v626
        %v628 = vpop.f32.mrf.mxu0
        %629 = vmatprep.mubr.f32.mxu0 %v360
        %630 = vmatmul.mubr.f32.gmra.mxu0 %v359
        %v631 = vpop.f32.mrf.mxu0
        %v632 = vadd.f32 0.0, %v631
        %v633 = vpop.f32.mrf.mxu0
        %634 = vmatprep.mubr.f32.mxu0 %v367
        %635 = vmatmul.mubr.f32.gmra.mxu0 %v366
        %v636 = vpop.f32.mrf.mxu0
        %v637 = vadd.f32 0.0, %v636
        %v638 = vpop.f32.mrf.mxu0
        %639 = vmatprep.mubr.f32.mxu0 %v374
        %640 = vmatmul.mubr.f32.gmra.mxu0 %v373
        %v641 = vpop.f32.mrf.mxu0
        %v642 = vadd.f32 0.0, %v641
        %v643 = vpop.f32.mrf.mxu0
        %644 = vmatprep.mubr.f32.mxu0 %v381
        %645 = vmatmul.mubr.f32.gmra.mxu0 %v380
        %v646 = vpop.f32.mrf.mxu0
        %v647 = vadd.f32 0.0, %v646
        %v648 = vpop.f32.mrf.mxu0
        %649 = vmatprep.mubr.f32.mxu0 %v388
        %650 = vmatmul.mubr.f32.gmra.mxu0 %v387
        %v651 = vpop.f32.mrf.mxu0
        %v652 = vadd.f32 0.0, %v651
        %v653 = vpop.f32.mrf.mxu0
        %654 = vmatprep.mubr.f32.mxu0 %v395
        %655 = vmatmul.mubr.f32.gmra.mxu0 %v394
        %v656 = vpop.f32.mrf.mxu0
        %v657 = vadd.f32 0.0, %v656
        %v658 = vpop.f32.mrf.mxu0
        %659 = vmatprep.mubr.f32.mxu0 %v402
        %660 = vmatmul.mubr.f32.gmra.mxu0 %v401
        %v661 = vpop.f32.mrf.mxu0
        %v662 = vadd.f32 0.0, %v661
        %v663 = vpop.f32.mrf.mxu0
        %664 = vdwg.mxu0
        %665 = vmatprep.subr.mxu0 0.0
        %666 = vmatpush1.msra.mxu0 %v455
        %667 = vmatprep.subr.mxu0 0.0
        %668 = vmatpush1.msra.mxu0 %v454
        %669 = vmatprep.subr.mxu0 0.0
        %670 = vmatpush1.msra.mxu0 %v453
        %671 = vmatprep.subr.mxu0 0.0
        %672 = vmatpush1.msra.mxu0 %v452
        %673 = vmatprep.subr.mxu0 0.0
        %674 = vmatpush1.msra.mxu0 %v451
        %675 = vmatprep.subr.mxu0 0.0
        %676 = vmatpush1.msra.mxu0 %v450
        %677 = vmatprep.subr.mxu0 0.0
        %678 = vmatpush1.msra.mxu0 %v449
        %679 = vmatprep.subr.mxu0 0.0
        %680 = vmatpush1.msra.mxu0 %v448
        %681 = vmatprep.subr.mxu0 0.0
        %682 = vmatpush1.msra.mxu0 %v447
        %683 = vmatprep.subr.mxu0 0.0
        %684 = vmatpush1.msra.mxu0 %v446
        %685 = vmatprep.subr.mxu0 0.0
        %686 = vmatpush1.msra.mxu0 %v445
        %687 = vmatprep.subr.mxu0 0.0
        %688 = vmatpush1.msra.mxu0 %v444
        %689 = vmatprep.subr.mxu0 0.0
        %690 = vmatpush1.msra.mxu0 %v443
        %691 = vmatprep.subr.mxu0 0.0
        %692 = vmatpush1.msra.mxu0 %v442
        %693 = vmatprep.subr.mxu0 0.0
        %694 = vmatpush1.msra.mxu0 %v441
        %695 = vmatprep.subr.mxu0 0.0
        %696 = vmatpush1.msra.mxu0 %v440
        %697 = vmatprep.subr.mxu0 0.0
        %698 = vmatpush2.msra.mxu0 %v471
        %699 = vmatprep.subr.mxu0 0.0
        %700 = vmatpush2.msra.mxu0 %v470
        %701 = vmatprep.subr.mxu0 0.0
        %702 = vmatpush2.msra.mxu0 %v469
        %703 = vmatprep.subr.mxu0 0.0
        %704 = vmatpush2.msra.mxu0 %v468
        %705 = vmatprep.subr.mxu0 0.0
        %706 = vmatpush2.msra.mxu0 %v467
        %707 = vmatprep.subr.mxu0 0.0
        %708 = vmatpush2.msra.mxu0 %v466
        %709 = vmatprep.subr.mxu0 0.0
        %710 = vmatpush2.msra.mxu0 %v465
        %711 = vmatprep.subr.mxu0 0.0
        %712 = vmatpush2.msra.mxu0 %v464
        %713 = vmatprep.subr.mxu0 0.0
        %714 = vmatpush2.msra.mxu0 %v463
        %715 = vmatprep.subr.mxu0 0.0
        %716 = vmatpush2.msra.mxu0 %v462
        %717 = vmatprep.subr.mxu0 0.0
        %718 = vmatpush2.msra.mxu0 %v461
        %719 = vmatprep.subr.mxu0 0.0
        %720 = vmatpush2.msra.mxu0 %v460
        %721 = vmatprep.subr.mxu0 0.0
        %722 = vmatpush2.msra.mxu0 %v459
        %723 = vmatprep.subr.mxu0 0.0
        %724 = vmatpush2.msra.mxu0 %v458
        %725 = vmatprep.subr.mxu0 0.0
        %726 = vmatpush2.msra.mxu0 %v457
        %727 = vmatprep.subr.mxu0 0.0
        %728 = vmatpush2.msra.mxu0 %v456
        %729 = vmatprep.mubr.f32.mxu0 %v299
        %730 = vmatmul.mubr.f32.gmra.mxu0 %v298
        %v731 = vpop.f32.mrf.mxu0
        %v732 = vadd.f32 %v587, %v731
        %v733 = vpop.f32.mrf.mxu0
        %734 = vmatprep.mubr.f32.mxu0 %v306
        %735 = vmatmul.mubr.f32.gmra.mxu0 %v305
        %v736 = vpop.f32.mrf.mxu0
        %v737 = vadd.f32 %v592, %v736
        %v738 = vpop.f32.mrf.mxu0
        %739 = vmatprep.mubr.f32.mxu0 %v313
        %740 = vmatmul.mubr.f32.gmra.mxu0 %v312
        %v741 = vpop.f32.mrf.mxu0
        %v742 = vadd.f32 %v597, %v741
        %v743 = vpop.f32.mrf.mxu0
        %744 = vmatprep.mubr.f32.mxu0 %v320
        %745 = vmatmul.mubr.f32.gmra.mxu0 %v319
        %v746 = vpop.f32.mrf.mxu0
        %v747 = vadd.f32 %v602, %v746
        %v748 = vpop.f32.mrf.mxu0
        %749 = vmatprep.mubr.f32.mxu0 %v327
        %750 = vmatmul.mubr.f32.gmra.mxu0 %v326
        %v751 = vpop.f32.mrf.mxu0
        %v752 = vadd.f32 %v607, %v751
        %v753 = vpop.f32.mrf.mxu0
        %754 = vmatprep.mubr.f32.mxu0 %v334
        %755 = vmatmul.mubr.f32.gmra.mxu0 %v333
        %v756 = vpop.f32.mrf.mxu0
        %v757 = vadd.f32 %v612, %v756
        %v758 = vpop.f32.mrf.mxu0
        %759 = vmatprep.mubr.f32.mxu0 %v341
        %760 = vmatmul.mubr.f32.gmra.mxu0 %v340
        %v761 = vpop.f32.mrf.mxu0
        %v762 = vadd.f32 %v617, %v761
        %v763 = vpop.f32.mrf.mxu0
        %764 = vmatprep.mubr.f32.mxu0 %v348
        %765 = vmatmul.mubr.f32.gmra.mxu0 %v347
        %v766 = vpop.f32.mrf.mxu0
        %v767 = vadd.f32 %v622, %v766
        %v768 = vpop.f32.mrf.mxu0
        %769 = vmatprep.mubr.f32.mxu0 %v355
        %770 = vmatmul.mubr.f32.gmra.mxu0 %v354
        %v771 = vpop.f32.mrf.mxu0
        %v772 = vadd.f32 %v627, %v771
        %v773 = vpop.f32.mrf.mxu0
        %774 = vmatprep.mubr.f32.mxu0 %v362
        %775 = vmatmul.mubr.f32.gmra.mxu0 %v361
        %v776 = vpop.f32.mrf.mxu0
        %v777 = vadd.f32 %v632, %v776
        %v778 = vpop.f32.mrf.mxu0
        %779 = vmatprep.mubr.f32.mxu0 %v369
        %780 = vmatmul.mubr.f32.gmra.mxu0 %v368
        %v781 = vpop.f32.mrf.mxu0
        %v782 = vadd.f32 %v637, %v781
        %v783 = vpop.f32.mrf.mxu0
        %784 = vmatprep.mubr.f32.mxu0 %v376
        %785 = vmatmul.mubr.f32.gmra.mxu0 %v375
        %v786 = vpop.f32.mrf.mxu0
        %v787 = vadd.f32 %v642, %v786
        %v788 = vpop.f32.mrf.mxu0
        %789 = vmatprep.mubr.f32.mxu0 %v383
        %790 = vmatmul.mubr.f32.gmra.mxu0 %v382
        %v791 = vpop.f32.mrf.mxu0
        %v792 = vadd.f32 %v647, %v791
        %v793 = vpop.f32.mrf.mxu0
        %794 = vmatprep.mubr.f32.mxu0 %v390
        %795 = vmatmul.mubr.f32.gmra.mxu0 %v389
        %v796 = vpop.f32.mrf.mxu0
        %v797 = vadd.f32 %v652, %v796
        %v798 = vpop.f32.mrf.mxu0
        %799 = vmatprep.mubr.f32.mxu0 %v397
        %800 = vmatmul.mubr.f32.gmra.mxu0 %v396
        %v801 = vpop.f32.mrf.mxu0
        %v802 = vadd.f32 %v657, %v801
        %v803 = vpop.f32.mrf.mxu0
        %804 = vmatprep.mubr.f32.mxu0 %v404
        %805 = vmatmul.mubr.f32.gmra.mxu0 %v403
        %v806 = vpop.f32.mrf.mxu0
        %v807 = vadd.f32 %v662, %v806
        %v808 = vpop.f32.mrf.mxu0
        %809 = vdwg.mxu0
        %810 = vmatprep.subr.mxu0 0.0
        %811 = vmatpush1.msra.mxu0 %v487
        %812 = vmatprep.subr.mxu0 0.0
        %813 = vmatpush1.msra.mxu0 %v486
        %814 = vmatprep.subr.mxu0 0.0
        %815 = vmatpush1.msra.mxu0 %v485
        %816 = vmatprep.subr.mxu0 0.0
        %817 = vmatpush1.msra.mxu0 %v484
        %818 = vmatprep.subr.mxu0 0.0
        %819 = vmatpush1.msra.mxu0 %v483
        %820 = vmatprep.subr.mxu0 0.0
        %821 = vmatpush1.msra.mxu0 %v482
        %822 = vmatprep.subr.mxu0 0.0
        %823 = vmatpush1.msra.mxu0 %v481
        %824 = vmatprep.subr.mxu0 0.0
        %825 = vmatpush1.msra.mxu0 %v480
        %826 = vmatprep.subr.mxu0 0.0
        %827 = vmatpush1.msra.mxu0 %v479
        %828 = vmatprep.subr.mxu0 0.0
        %829 = vmatpush1.msra.mxu0 %v478
        %830 = vmatprep.subr.mxu0 0.0
        %831 = vmatpush1.msra.mxu0 %v477
        %832 = vmatprep.subr.mxu0 0.0
        %833 = vmatpush1.msra.mxu0 %v476
        %834 = vmatprep.subr.mxu0 0.0
        %835 = vmatpush1.msra.mxu0 %v475
        %836 = vmatprep.subr.mxu0 0.0
        %837 = vmatpush1.msra.mxu0 %v474
        %838 = vmatprep.subr.mxu0 0.0
        %839 = vmatpush1.msra.mxu0 %v473
        %840 = vmatprep.subr.mxu0 0.0
        %841 = vmatpush1.msra.mxu0 %v472
        %842 = vmatprep.subr.mxu0 0.0
        %843 = vmatpush2.msra.mxu0 %v503
        %844 = vmatprep.subr.mxu0 0.0
        %845 = vmatpush2.msra.mxu0 %v502
        %846 = vmatprep.subr.mxu0 0.0
        %847 = vmatpush2.msra.mxu0 %v501
        %848 = vmatprep.subr.mxu0 0.0
        %849 = vmatpush2.msra.mxu0 %v500
        %850 = vmatprep.subr.mxu0 0.0
        %851 = vmatpush2.msra.mxu0 %v499
        %852 = vmatprep.subr.mxu0 0.0
        %853 = vmatpush2.msra.mxu0 %v498
        %854 = vmatprep.subr.mxu0 0.0
        %855 = vmatpush2.msra.mxu0 %v497
        %856 = vmatprep.subr.mxu0 0.0
        %857 = vmatpush2.msra.mxu0 %v496
        %858 = vmatprep.subr.mxu0 0.0
        %859 = vmatpush2.msra.mxu0 %v495
        %860 = vmatprep.subr.mxu0 0.0
        %861 = vmatpush2.msra.mxu0 %v494
        %862 = vmatprep.subr.mxu0 0.0
        %863 = vmatpush2.msra.mxu0 %v493
        %864 = vmatprep.subr.mxu0 0.0
        %865 = vmatpush2.msra.mxu0 %v492
        %866 = vmatprep.subr.mxu0 0.0
        %867 = vmatpush2.msra.mxu0 %v491
        %868 = vmatprep.subr.mxu0 0.0
        %869 = vmatpush2.msra.mxu0 %v490
        %870 = vmatprep.subr.mxu0 0.0
        %871 = vmatpush2.msra.mxu0 %v489
        %872 = vmatprep.subr.mxu0 0.0
        %873 = vmatpush2.msra.mxu0 %v488
        %874 = vmatprep.mubr.f32.mxu0 %v301
        %875 = vmatmul.mubr.f32.gmra.mxu0 %v300
        %v876 = vpop.f32.mrf.mxu0
        %v877 = vadd.f32 %v732, %v876
        %v878 = vpop.f32.mrf.mxu0
        %879 = vmatprep.mubr.f32.mxu0 %v308
        %880 = vmatmul.mubr.f32.gmra.mxu0 %v307
        %v881 = vpop.f32.mrf.mxu0
        %v882 = vadd.f32 %v737, %v881
        %v883 = vpop.f32.mrf.mxu0
        %884 = vmatprep.mubr.f32.mxu0 %v315
        %885 = vmatmul.mubr.f32.gmra.mxu0 %v314
        %v886 = vpop.f32.mrf.mxu0
        %v887 = vadd.f32 %v742, %v886
        %v888 = vpop.f32.mrf.mxu0
        %889 = vmatprep.mubr.f32.mxu0 %v322
        %890 = vmatmul.mubr.f32.gmra.mxu0 %v321
        %v891 = vpop.f32.mrf.mxu0
        %v892 = vadd.f32 %v747, %v891
        %v893 = vpop.f32.mrf.mxu0
        %894 = vmatprep.mubr.f32.mxu0 %v329
        %895 = vmatmul.mubr.f32.gmra.mxu0 %v328
        %v896 = vpop.f32.mrf.mxu0
        %v897 = vadd.f32 %v752, %v896
        %v898 = vpop.f32.mrf.mxu0
        %899 = vmatprep.mubr.f32.mxu0 %v336
        %900 = vmatmul.mubr.f32.gmra.mxu0 %v335
        %v901 = vpop.f32.mrf.mxu0
        %v902 = vadd.f32 %v757, %v901
        %v903 = vpop.f32.mrf.mxu0
        %904 = vmatprep.mubr.f32.mxu0 %v343
        %905 = vmatmul.mubr.f32.gmra.mxu0 %v342
        %v906 = vpop.f32.mrf.mxu0
        %v907 = vadd.f32 %v762, %v906
        %v908 = vpop.f32.mrf.mxu0
        %909 = vmatprep.mubr.f32.mxu0 %v350
        %910 = vmatmul.mubr.f32.gmra.mxu0 %v349
        %v911 = vpop.f32.mrf.mxu0
        %v912 = vadd.f32 %v767, %v911
        %v913 = vpop.f32.mrf.mxu0
        %914 = vmatprep.mubr.f32.mxu0 %v357
        %915 = vmatmul.mubr.f32.gmra.mxu0 %v356
        %v916 = vpop.f32.mrf.mxu0
        %v917 = vadd.f32 %v772, %v916
        %v918 = vpop.f32.mrf.mxu0
        %919 = vmatprep.mubr.f32.mxu0 %v364
        %920 = vmatmul.mubr.f32.gmra.mxu0 %v363
        %v921 = vpop.f32.mrf.mxu0
        %v922 = vadd.f32 %v777, %v921
        %v923 = vpop.f32.mrf.mxu0
        %924 = vmatprep.mubr.f32.mxu0 %v371
        %925 = vmatmul.mubr.f32.gmra.mxu0 %v370
        %v926 = vpop.f32.mrf.mxu0
        %v927 = vadd.f32 %v782, %v926
        %v928 = vpop.f32.mrf.mxu0
        %929 = vmatprep.mubr.f32.mxu0 %v378
        %930 = vmatmul.mubr.f32.gmra.mxu0 %v377
        %v931 = vpop.f32.mrf.mxu0
        %v932 = vadd.f32 %v787, %v931
        %v933 = vpop.f32.mrf.mxu0
        %934 = vmatprep.mubr.f32.mxu0 %v385
        %935 = vmatmul.mubr.f32.gmra.mxu0 %v384
        %v936 = vpop.f32.mrf.mxu0
        %v937 = vadd.f32 %v792, %v936
        %v938 = vpop.f32.mrf.mxu0
        %939 = vmatprep.mubr.f32.mxu0 %v392
        %940 = vmatmul.mubr.f32.gmra.mxu0 %v391
        %v941 = vpop.f32.mrf.mxu0
        %v942 = vadd.f32 %v797, %v941
        %v943 = vpop.f32.mrf.mxu0
        %944 = vmatprep.mubr.f32.mxu0 %v399
        %945 = vmatmul.mubr.f32.gmra.mxu0 %v398
        %v946 = vpop.f32.mrf.mxu0
        %v947 = vadd.f32 %v802, %v946
        %v948 = vpop.f32.mrf.mxu0
        %949 = vmatprep.mubr.f32.mxu0 %v406
        %950 = vmatmul.mubr.f32.gmra.mxu0 %v405
        %v951 = vpop.f32.mrf.mxu0
        %v952 = vadd.f32 %v807, %v951
        %v953 = vpop.f32.mrf.mxu0
        %954 = vdwg.mxu0
        %955 = vmatprep.subr.mxu0 0.0
        %956 = vmatpush1.msra.mxu0 %v519
        %957 = vmatprep.subr.mxu0 0.0
        %958 = vmatpush1.msra.mxu0 %v518
        %959 = vmatprep.subr.mxu0 0.0
        %960 = vmatpush1.msra.mxu0 %v517
        %961 = vmatprep.subr.mxu0 0.0
        %962 = vmatpush1.msra.mxu0 %v516
        %963 = vmatprep.subr.mxu0 0.0
        %964 = vmatpush1.msra.mxu0 %v515
        %965 = vmatprep.subr.mxu0 0.0
        %966 = vmatpush1.msra.mxu0 %v514
        %967 = vmatprep.subr.mxu0 0.0
        %968 = vmatpush1.msra.mxu0 %v513
        %969 = vmatprep.subr.mxu0 0.0
        %970 = vmatpush1.msra.mxu0 %v512
        %971 = vmatprep.subr.mxu0 0.0
        %972 = vmatpush1.msra.mxu0 %v511
        %973 = vmatprep.subr.mxu0 0.0
        %974 = vmatpush1.msra.mxu0 %v510
        %975 = vmatprep.subr.mxu0 0.0
        %976 = vmatpush1.msra.mxu0 %v509
        %977 = vmatprep.subr.mxu0 0.0
        %978 = vmatpush1.msra.mxu0 %v508
        %979 = vmatprep.subr.mxu0 0.0
        %980 = vmatpush1.msra.mxu0 %v507
        %981 = vmatprep.subr.mxu0 0.0
        %982 = vmatpush1.msra.mxu0 %v506
        %983 = vmatprep.subr.mxu0 0.0
        %984 = vmatpush1.msra.mxu0 %v505
        %985 = vmatprep.subr.mxu0 0.0
        %986 = vmatpush1.msra.mxu0 %v504
        %987 = vmatprep.subr.mxu0 0.0
        %988 = vmatpush2.msra.mxu0 0.0
        %989 = vmatprep.subr.mxu0 0.0
        %990 = vmatpush2.msra.mxu0 0.0
        %991 = vmatprep.subr.mxu0 0.0
        %992 = vmatpush2.msra.mxu0 0.0
        %993 = vmatprep.subr.mxu0 0.0
        %994 = vmatpush2.msra.mxu0 0.0
        %995 = vmatprep.subr.mxu0 0.0
        %996 = vmatpush2.msra.mxu0 0.0
        %997 = vmatprep.subr.mxu0 0.0
        %998 = vmatpush2.msra.mxu0 0.0
        %999 = vmatprep.subr.mxu0 0.0
        %1000 = vmatpush2.msra.mxu0 0.0
        %1001 = vmatprep.subr.mxu0 0.0
        %1002 = vmatpush2.msra.mxu0 0.0
        %1003 = vmatprep.subr.mxu0 0.0
        %1004 = vmatpush2.msra.mxu0 0.0
        %1005 = vmatprep.subr.mxu0 0.0
        %1006 = vmatpush2.msra.mxu0 0.0
        %1007 = vmatprep.subr.mxu0 0.0
        %1008 = vmatpush2.msra.mxu0 0.0
        %1009 = vmatprep.subr.mxu0 0.0
        %1010 = vmatpush2.msra.mxu0 0.0
        %1011 = vmatprep.subr.mxu0 0.0
        %1012 = vmatpush2.msra.mxu0 0.0
        %1013 = vmatprep.subr.mxu0 0.0
        %1014 = vmatpush2.msra.mxu0 0.0
        %1015 = vmatprep.subr.mxu0 0.0
        %1016 = vmatpush2.msra.mxu0 0.0
        %1017 = vmatprep.subr.mxu0 0.0
        %1018 = vmatpush2.msra.mxu0 0.0
        %1019 = vmatprep.mubr.f32.mxu0 0.0
        %1020 = vmatmul.mubr.f32.gmra.mxu0 %v302
        %v1021 = vpop.f32.mrf.mxu0
        %v1022 = vadd.f32 %v877, %v1021
        %v1023 = vpop.f32.mrf.mxu0
        %1024 = vmatprep.mubr.f32.mxu0 0.0
        %1025 = vmatmul.mubr.f32.gmra.mxu0 %v309
        %v1026 = vpop.f32.mrf.mxu0
        %v1027 = vadd.f32 %v882, %v1026
        %v1028 = vpop.f32.mrf.mxu0
        %1029 = vmatprep.mubr.f32.mxu0 0.0
        %1030 = vmatmul.mubr.f32.gmra.mxu0 %v316
        %v1031 = vpop.f32.mrf.mxu0
        %v1032 = vadd.f32 %v887, %v1031
        %v1033 = vpop.f32.mrf.mxu0
        %1034 = vmatprep.mubr.f32.mxu0 0.0
        %1035 = vmatmul.mubr.f32.gmra.mxu0 %v323
        %v1036 = vpop.f32.mrf.mxu0
        %v1037 = vadd.f32 %v892, %v1036
        %v1038 = vpop.f32.mrf.mxu0
        %1039 = vmatprep.mubr.f32.mxu0 0.0
        %1040 = vmatmul.mubr.f32.gmra.mxu0 %v330
        %v1041 = vpop.f32.mrf.mxu0
        %v1042 = vadd.f32 %v897, %v1041
        %v1043 = vpop.f32.mrf.mxu0
        %1044 = vmatprep.mubr.f32.mxu0 0.0
        %1045 = vmatmul.mubr.f32.gmra.mxu0 %v337
        %v1046 = vpop.f32.mrf.mxu0
        %v1047 = vadd.f32 %v902, %v1046
        %v1048 = vpop.f32.mrf.mxu0
        %1049 = vmatprep.mubr.f32.mxu0 0.0
        %1050 = vmatmul.mubr.f32.gmra.mxu0 %v344
        %v1051 = vpop.f32.mrf.mxu0
        %v1052 = vadd.f32 %v907, %v1051
        %v1053 = vpop.f32.mrf.mxu0
        %1054 = vmatprep.mubr.f32.mxu0 0.0
        %1055 = vmatmul.mubr.f32.gmra.mxu0 %v351
        %v1056 = vpop.f32.mrf.mxu0
        %v1057 = vadd.f32 %v912, %v1056
        %v1058 = vpop.f32.mrf.mxu0
        %1059 = vmatprep.mubr.f32.mxu0 0.0
        %1060 = vmatmul.mubr.f32.gmra.mxu0 %v358
        %v1061 = vpop.f32.mrf.mxu0
        %v1062 = vadd.f32 %v917, %v1061
        %v1063 = vpop.f32.mrf.mxu0
        %1064 = vmatprep.mubr.f32.mxu0 0.0
        %1065 = vmatmul.mubr.f32.gmra.mxu0 %v365
        %v1066 = vpop.f32.mrf.mxu0
        %v1067 = vadd.f32 %v922, %v1066
        %v1068 = vpop.f32.mrf.mxu0
        %1069 = vmatprep.mubr.f32.mxu0 0.0
        %1070 = vmatmul.mubr.f32.gmra.mxu0 %v372
        %v1071 = vpop.f32.mrf.mxu0
        %v1072 = vadd.f32 %v927, %v1071
        %v1073 = vpop.f32.mrf.mxu0
        %1074 = vmatprep.mubr.f32.mxu0 0.0
        %1075 = vmatmul.mubr.f32.gmra.mxu0 %v379
        %v1076 = vpop.f32.mrf.mxu0
        %v1077 = vadd.f32 %v932, %v1076
        %v1078 = vpop.f32.mrf.mxu0
        %1079 = vmatprep.mubr.f32.mxu0 0.0
        %1080 = vmatmul.mubr.f32.gmra.mxu0 %v386
        %v1081 = vpop.f32.mrf.mxu0
        %v1082 = vadd.f32 %v937, %v1081
        %v1083 = vpop.f32.mrf.mxu0
        %1084 = vmatprep.mubr.f32.mxu0 0.0
        %1085 = vmatmul.mubr.f32.gmra.mxu0 %v393
        %v1086 = vpop.f32.mrf.mxu0
        %v1087 = vadd.f32 %v942, %v1086
        %v1088 = vpop.f32.mrf.mxu0
        %1089 = vmatprep.mubr.f32.mxu0 0.0
        %1090 = vmatmul.mubr.f32.gmra.mxu0 %v400
        %v1091 = vpop.f32.mrf.mxu0
        %v1092 = vadd.f32 %v947, %v1091
        %v1093 = vpop.f32.mrf.mxu0
        %1094 = vmatprep.mubr.f32.mxu0 0.0
        %1095 = vmatmul.mubr.f32.gmra.mxu0 %v407
        %v1096 = vpop.f32.mrf.mxu0
        %v1097 = vadd.f32 %v952, %v1096
        %v1098 = vpop.f32.mrf.mxu0
        %1099 = vdwg.mxu0
        %v1100 = vadd.f32 %v280, %v1022
        %v1101 = vadd.f32 %v281, %v1027
        %v1102 = vadd.f32 %v282, %v1032
        %v1103 = vadd.f32 %v283, %v1037
        %v1104 = vadd.f32 %v284, %v1042
        %v1105 = vadd.f32 %v285, %v1047
        %v1106 = vadd.f32 %v286, %v1052
        %v1107 = vadd.f32 %v287, %v1057
        %v1108 = vadd.f32 %v288, %v1062
        %v1109 = vadd.f32 %v289, %v1067
        %v1110 = vadd.f32 %v290, %v1072
        %v1111 = vadd.f32 %v291, %v1077
        %v1112 = vadd.f32 %v292, %v1082
        %v1113 = vadd.f32 %v293, %v1087
        %v1114 = vadd.f32 %v294, %v1092
        %v1115 = vadd.f32 %v295, %v1097
        %1116 = vst [vmem:[%s252] sm:$0xff] %v1100
        %1117 = vst [vmem:[%s252 + $0x8] sm:$0xff] %v1101
        %1118 = vst [vmem:[%s252 + $0x10] sm:$0xff] %v1102
        %1119 = vst [vmem:[%s252 + $0x18] sm:$0xff] %v1103
        %1120 = vst [vmem:[%s252 + $0x20] sm:$0xff] %v1104
        %1121 = vst [vmem:[%s252 + $0x28] sm:$0xff] %v1105
        %1122 = vst [vmem:[%s252 + $0x30] sm:$0xff] %v1106
        %1123 = vst [vmem:[%s252 + $0x38] sm:$0xff] %v1107
        %1124 = vst [vmem:[%s252 + $0x40] sm:$0xff] %v1108
        %1125 = vst [vmem:[%s252 + $0x48] sm:$0xff] %v1109
        %1126 = vst [vmem:[%s252 + $0x50] sm:$0xff] %v1110
        %1127 = vst [vmem:[%s252 + $0x58] sm:$0xff] %v1111
        %1128 = vst [vmem:[%s252 + $0x60] sm:$0xff] %v1112
        %1129 = vst [vmem:[%s252 + $0x68] sm:$0xff] %v1113
        %1130 = vst [vmem:[%s252 + $0x70] sm:$0xff] %v1114
        %1131 = vst [vmem:[%s252 + $0x78] sm:$0xff] %v1115
        // Predicated region
        $region45: #{tpu_custom_call.1} parent=31 // pred_check
          %p1132 = pneg %p260
        $region46: #{tpu_custom_call.1} parent=31 // pred_check_branch
          %1134 = sbr.rel (%p1132) target = $region48
        $region47: #{tpu_custom_call.1} parent=31 // pred_region
          %v1135 = vld [vmem:[%s252] sm:$0xff]
          %v1136 = vld [vmem:[%s252 + $0x8] sm:$0xff]
          %v1137 = vld [vmem:[%s252 + $0x10] sm:$0xff]
          %v1138 = vld [vmem:[%s252 + $0x18] sm:$0xff]
          %v1139 = vld [vmem:[%s252 + $0x20] sm:$0xff]
          %v1140 = vld [vmem:[%s252 + $0x28] sm:$0xff]
          %v1141 = vld [vmem:[%s252 + $0x30] sm:$0xff]
          %v1142 = vld [vmem:[%s252 + $0x38] sm:$0xff]
          %v1143 = vld [vmem:[%s252 + $0x40] sm:$0xff]
          %v1144 = vld [vmem:[%s252 + $0x48] sm:$0xff]
          %v1145 = vld [vmem:[%s252 + $0x50] sm:$0xff]
          %v1146 = vld [vmem:[%s252 + $0x58] sm:$0xff]
          %v1147 = vld [vmem:[%s252 + $0x60] sm:$0xff]
          %v1148 = vld [vmem:[%s252 + $0x68] sm:$0xff]
          %v1149 = vld [vmem:[%s252 + $0x70] sm:$0xff]
          %v1150 = vld [vmem:[%s252 + $0x78] sm:$0xff]
          %v1151 = vld [vmem:[%s258] sm:$0x1]
          %v1153 = vlaneseq
          %v1154 = vshrl.u32 %v1153, 7
          %v1155 = vsub.s32 0, %v1154
          %v1156 = vrot.slane %v1151, %v1155
          %v1158 = vadd.f32 %v1135, %v1156
          %v1159 = vadd.f32 %v1136, %v1156
          %v1160 = vadd.f32 %v1137, %v1156
          %v1161 = vadd.f32 %v1138, %v1156
          %v1162 = vadd.f32 %v1139, %v1156
          %v1163 = vadd.f32 %v1140, %v1156
          %v1164 = vadd.f32 %v1141, %v1156
          %v1165 = vadd.f32 %v1142, %v1156
          %v1166 = vadd.f32 %v1143, %v1156
          %v1167 = vadd.f32 %v1144, %v1156
          %v1168 = vadd.f32 %v1145, %v1156
          %v1169 = vadd.f32 %v1146, %v1156
          %v1170 = vadd.f32 %v1147, %v1156
          %v1171 = vadd.f32 %v1148, %v1156
          %v1172 = vadd.f32 %v1149, %v1156
          %v1173 = vadd.f32 %v1150, %v1156
          %v1174 = vmax.f32 %v1158, 0.0
          %v1175 = vmax.f32 %v1159, 0.0
          %v1176 = vmax.f32 %v1160, 0.0
          %v1177 = vmax.f32 %v1161, 0.0
          %v1178 = vmax.f32 %v1162, 0.0
          %v1179 = vmax.f32 %v1163, 0.0
          %v1180 = vmax.f32 %v1164, 0.0
          %v1181 = vmax.f32 %v1165, 0.0
          %v1182 = vmax.f32 %v1166, 0.0
          %v1183 = vmax.f32 %v1167, 0.0
          %v1184 = vmax.f32 %v1168, 0.0
          %v1185 = vmax.f32 %v1169, 0.0
          %v1186 = vmax.f32 %v1170, 0.0
          %v1187 = vmax.f32 %v1171, 0.0
          %v1188 = vmax.f32 %v1172, 0.0
          %v1189 = vmax.f32 %v1173, 0.0
          %1190 = vst [vmem:[%s252] sm:$0xff] %v1174
          %1191 = vst [vmem:[%s252 + $0x8] sm:$0xff] %v1175
          %1192 = vst [vmem:[%s252 + $0x10] sm:$0xff] %v1176
          %1193 = vst [vmem:[%s252 + $0x18] sm:$0xff] %v1177
          %1194 = vst [vmem:[%s252 + $0x20] sm:$0xff] %v1178
          %1195 = vst [vmem:[%s252 + $0x28] sm:$0xff] %v1179
          %1196 = vst [vmem:[%s252 + $0x30] sm:$0xff] %v1180
          %1197 = vst [vmem:[%s252 + $0x38] sm:$0xff] %v1181
          %1198 = vst [vmem:[%s252 + $0x40] sm:$0xff] %v1182
          %1199 = vst [vmem:[%s252 + $0x48] sm:$0xff] %v1183
          %1200 = vst [vmem:[%s252 + $0x50] sm:$0xff] %v1184
          %1201 = vst [vmem:[%s252 + $0x58] sm:$0xff] %v1185
          %1202 = vst [vmem:[%s252 + $0x60] sm:$0xff] %v1186
          %1203 = vst [vmem:[%s252 + $0x68] sm:$0xff] %v1187
          %1204 = vst [vmem:[%s252 + $0x70] sm:$0xff] %v1188
          %1205 = vst [vmem:[%s252 + $0x78] sm:$0xff] %v1189
        $region48: #{tpu_custom_call.1} parent=31 // pred_fallthru
          _
        %s1206 = sand.u32 %s132, 1
        %s1207 = scalar_lea.sflag [#allocation4], %s1206
        %s1208 = sand.u32 %s132, 1
        %s1209 = smul.addr %s1208, 128
        %s1210 = scalar_lea.vmem [#allocation7], %s1209
        // Predicated region
        $region49: #{tpu_custom_call.1} parent=31 // pred_check
          %p1211 = pneg %p142
        $region50: #{tpu_custom_call.1} parent=31 // pred_check_branch
          %1213 = sbr.rel (%p1211) target = $region52
        $region51: #{tpu_custom_call.1} parent=31 // pred_region
          %s1214 = smul.u32 16, %s26
          %s1216 = ssub.s32 2048, 2048
          %1217 = vsyncadd %s1207, %s1216
          %s1218 = smul.addr %s1214, 2
          %s1219 = sadd.s32 %s27, %s1218
          %s1220 = smul.addr %s1219, 128
          %s1221 = scalar_lea.hbm %s3, %s1220
          %s1222 = sshll.u32 %s1210, 4
          %s1223 = int_to_ptr.vmem [resolvable:$true] %s1222
          %1228 = dma.vmem_to_hbm [thread:$0]  %s1223, 2048, %s1221, %s1207, 128, 256, 8
        $region52: #{tpu_custom_call.1} parent=31 // pred_fallthru
          _
      $region32: #{tpu_custom_call.1} parent=5 // pred_fallthru
        _
      %p1229 = scmp.le.s32.totalorder 2, %s16
      // Predicated region
      $region53: #{tpu_custom_call.1} parent=5 // pred_check
        %p1230 = pneg %p1229
      $region54: #{tpu_custom_call.1} parent=5 // pred_check_branch
        %1232 = sbr.rel (%p1230) target = $region56
      $region55: #{tpu_custom_call.1} parent=5 // pred_region
        %s1233 = ssub.s32 %s16, 2
        // Predicated region
        $region57: #{tpu_custom_call.1} parent=55 // pred_check
          %p1234 = pneg %p148
        $region58: #{tpu_custom_call.1} parent=55 // pred_check_branch
          %1236 = sbr.rel (%p1234) target = $region60
        $region59: #{tpu_custom_call.1} parent=55 // pred_region
          %s1237 = sand.u32 %s133, 1
          %s1238 = scalar_lea.sflag [#allocation4], %s1237
          %s1239 = sand.u32 %s133, 1
          %s1240 = smul.addr %s1239, 128
          %s1241 = scalar_lea.vmem [#allocation7], %s1240
          %1242 = dma.done %s1238, 2048
        $region60: #{tpu_custom_call.1} parent=55 // pred_fallthru
          _
      $region56: #{tpu_custom_call.1} parent=5 // pred_fallthru
        _
    $region6: #{tpu_custom_call.1} parent=1 // loop_footer
      %s20 = sadd.s32 1, %s16
    $region7: #{tpu_custom_call.1} parent=1 // loop_footer_branch
      %15 = sbr.rel target = $region3
    $region8: #{tpu_custom_call.1} parent=1 // loop_exit
      _
    %1243 = vsyncpa [#allocation3], 1
    %s1244 = scalar_lea.sflag [#allocation3], 1
    %1245 = vsyncpa %s1244, 1
    %1246 = vsyncpa [#allocation6], 1
    %s1247 = scalar_lea.sflag [#allocation6], 1
    %1248 = vsyncpa %s1247, 1
    %1249 = vsyncpa [#allocation4], 1
    %s1250 = scalar_lea.sflag [#allocation4], 1
    %1251 = vsyncpa %s1250, 1

</llo_original>
